<compile_context>
chip_gen: v6e
topology: v6e:2x2x1
jax: 0.10.0
libtpu: 0.0.40
codegen_flags: <defaults>
</compile_context>

<pallas_src>
import functools

import jax
import jax.numpy as jnp
from jax.experimental import pallas as pl
from jax.experimental.pallas import tpu as pltpu


def _residual_ff_kernel(x_ref, w1_ref, b1_ref, w2_ref, b2_ref, o_ref, *, exact_gelu):
    # One row-tile of tokens; full (padded) weight matrices are resident in VMEM.
    x = x_ref[...]                                                  # (tm, D), native dtype
    # MXU consumes the native dtype (bf16 stays bf16); accumulate in f32.
    h = jnp.dot(x, w1_ref[...], preferred_element_type=jnp.float32)  # (tm, H) f32
    h = h + b1_ref[...].astype(jnp.float32)                          # broadcast (1, H)
    # PyTorch nn.GELU defaults to the exact erf form; tanh approximation is the
    # default here (proven Mosaic lowering), switchable via exact_gelu.
    h = jax.nn.gelu(h, approximate=not exact_gelu)
    y = jnp.dot(h.astype(w2_ref.dtype), w2_ref[...],
                preferred_element_type=jnp.float32)                  # (tm, D) f32
    y = y + b2_ref[...].astype(jnp.float32)                          # broadcast (1, D)
    o_ref[...] = (y + x.astype(jnp.float32)).astype(o_ref.dtype)     # fused residual add


def _round_up(n, m):
    return ((n + m - 1) // m) * m


def _pad2d(a, rows, cols):
    pr, pc = rows - a.shape[0], cols - a.shape[1]
    if pr or pc:
        a = jnp.pad(a, ((0, pr), (0, pc)))
    return a


def residual_feedforward(x, w1, b1, w2, b2, *, tile_rows=256, exact_gelu=False):
    """Computes FeedForward(x) + x with a single fused Pallas TPU kernel.

    x  : (..., D)   (e.g. (B, S, D))
    w1 : (D, H),  b1 : (H,)
    w2 : (H, D),  b2 : (D,)
    """
    orig_shape = x.shape
    D = x.shape[-1]
    H = w1.shape[1]
    x2d = x.reshape(-1, D)
    N = x2d.shape[0]

    # Lane-dense layout: last (lane) dims padded to multiples of 128 so the
    # output stores are unmasked vst.  Row tile is a multiple of 8 (sublane),
    # default 256 (multiple of both the 128- and 256-wide MXU native dims) to
    # amortize the ~0.35us per-grid-step overhead.
    Dp = _round_up(max(D, 128), 128)
    Hp = _round_up(max(H, 128), 128)
    tm = _round_up(min(tile_rows, _round_up(N, 8)), 8)
    Np = _round_up(N, tm)                      # ragged tail handled by zero padding

    x_p = _pad2d(x2d, Np, Dp)
    w1_p = _pad2d(w1, Dp, Hp)
    w2_p = _pad2d(w2, Hp, Dp)
    b1_p = _pad2d(b1.reshape(1, H), 1, Hp)
    b2_p = _pad2d(b2.reshape(1, D), 1, Dp)

    grid = (Np // tm,)
    act_bytes = x2d.dtype.itemsize
    w_bytes = w1.dtype.itemsize
    cost = pl.CostEstimate(
        flops=2 * Np * Dp * Hp * 2,                      # two matmuls
        transcendentals=Np * Hp,                         # GELU
        bytes_accessed=(2 * Np * Dp * act_bytes          # x in + out
                        + (Dp * Hp + Hp * Dp + Hp + Dp) * w_bytes),
    )

    kernel = functools.partial(_residual_ff_kernel, exact_gelu=exact_gelu)

    def call(single_buffer_weights):
        # Constant-index weight/bias blocks: request single buffering so their
        # VMEM footprint is not doubled (matters most on v7x's 64 MiB VMEM).
        wkw = ({"pipeline_mode": pl.Buffered(buffer_count=1)}
               if single_buffer_weights else {})
        return pl.pallas_call(
            kernel,
            out_shape=jax.ShapeDtypeStruct((Np, Dp), x2d.dtype),
            grid_spec=pltpu.PrefetchScalarGridSpec(
                num_scalar_prefetch=0,
                grid=grid,
                in_specs=[
                    pl.BlockSpec((tm, Dp), lambda i: (i, 0)),          # x row tile
                    pl.BlockSpec((Dp, Hp), lambda i: (0, 0), **wkw),   # w1 (resident)
                    pl.BlockSpec((1, Hp), lambda i: (0, 0), **wkw),    # b1
                    pl.BlockSpec((Hp, Dp), lambda i: (0, 0), **wkw),   # w2 (resident)
                    pl.BlockSpec((1, Dp), lambda i: (0, 0), **wkw),    # b2
                ],
                out_specs=pl.BlockSpec((tm, Dp), lambda i: (i, 0)),
            ),
            compiler_params=pltpu.CompilerParams(
                dimension_semantics=("parallel",),        # v7x: shard rows over 2 TCs
                vmem_limit_bytes=64 * 1024 * 1024,        # above 16/32 MiB scoped defaults
            ),
            cost_estimate=cost,
        )(x_p, w1_p, b1_p, w2_p, b2_p)

    # TODO(synk): for FFN sizes whose weights exceed v7x's 64 MiB VMEM
    # (e.g. D=4096, H=16384), add an H-blocked reduction grid axis ("arbitrary",
    # placed last) with an f32 accumulator scratch instead of fully-resident w1/w2.
    try:
        out2d = jax.block_until_ready(call(True))
    except Exception:
        # pipeline_mode=Buffered(1) not supported on this jax build -> default buffering.
        out2d = jax.block_until_ready(call(False))

    return out2d[:N, :D].reshape(orig_shape)


def _reference(x, w1, b1, w2, b2):
    h = jax.nn.gelu(jnp.dot(x, w1) + b1, approximate=True)
    return jnp.dot(h, w2) + b2 + x


if __name__ == "__main__":
    key = jax.random.PRNGKey(0)
    B, S, D, H = 2, 8, 32, 64   # small transformer-ish shapes

    k_x, k_w1, k_b1, k_w2, k_b2 = jax.random.split(key, 5)
    x = jax.random.normal(k_x, (B, S, D), dtype=jnp.float32)
    # deterministic synthetic parameters (nn.Linear-style scale)
    w1 = jax.random.normal(k_w1, (D, H), dtype=jnp.float32) * (1.0 / D ** 0.5)
    b1 = jax.random.normal(k_b1, (H,), dtype=jnp.float32) * 0.01
    w2 = jax.random.normal(k_w2, (H, D), dtype=jnp.float32) * (1.0 / H ** 0.5)
    b2 = jax.random.normal(k_b2, (D,), dtype=jnp.float32) * 0.01

    # f32 path
    out = jax.block_until_ready(residual_feedforward(x, w1, b1, w2, b2))
    ref = _reference(x.reshape(B * S, D), w1, b1, w2, b2).reshape(B, S, D)
    assert out.shape == x.shape and out.dtype == x.dtype
    assert jnp.allclose(out, ref, atol=1e-4, rtol=1e-4), "f32 mismatch vs reference"

    # bf16 path: operands are fed to the MXU without upcast, accumulation in f32.
    xb = x.astype(jnp.bfloat16)
    w1b, b1b = w1.astype(jnp.bfloat16), b1.astype(jnp.bfloat16)
    w2b, b2b = w2.astype(jnp.bfloat16), b2.astype(jnp.bfloat16)
    out_b = jax.block_until_ready(residual_feedforward(xb, w1b, b1b, w2b, b2b))
    assert out_b.shape == x.shape and out_b.dtype == jnp.bfloat16
    assert jnp.allclose(out_b.astype(jnp.float32), ref, atol=1e-1, rtol=1e-1), \
        "bf16 mismatch vs reference"

    print("KERNEL_OK")
</pallas_src>

<mosaic_0001>
module attributes {stable_mosaic.version = 11 : i64} {
  func.func @_residual_ff_kernel(%arg0: i32, %arg1: memref<16x128xf32, #tpu.memory_space<vmem>>, %arg2: memref<128x128xf32, #tpu.memory_space<vmem>>, %arg3: memref<1x128xf32, #tpu.memory_space<vmem>>, %arg4: memref<128x128xf32, #tpu.memory_space<vmem>>, %arg5: memref<1x128xf32, #tpu.memory_space<vmem>>, %arg6: memref<16x128xf32, #tpu.memory_space<vmem>>) attributes {dimension_semantics = [#tpu.dimension_semantics<parallel>], iteration_bounds = array<i64: 1>, scalar_prefetch = 0 : i64, scratch_operands = 0 : i64, tpu.core_type = #tpu.core_type<tc>, window_params = [{transform_indices = @transform_0, window_bounds = array<i64: 16, 128>}, {pipeline_mode = #tpu.pipeline_mode<synchronous>, transform_indices = @transform_1, window_bounds = array<i64: 128, 128>}, {pipeline_mode = #tpu.pipeline_mode<synchronous>, transform_indices = @transform_2, window_bounds = array<i64: 1, 128>}, {pipeline_mode = #tpu.pipeline_mode<synchronous>, transform_indices = @transform_3, window_bounds = array<i64: 128, 128>}, {pipeline_mode = #tpu.pipeline_mode<synchronous>, transform_indices = @transform_4, window_bounds = array<i64: 1, 128>}, {transform_indices = @transform_5, window_bounds = array<i64: 16, 128>}]} {
    %c0 = arith.constant 0 : index
    %c0_0 = arith.constant 0 : index
    %0 = vector.load %arg1[%c0, %c0_0] : memref<16x128xf32, #tpu.memory_space<vmem>>, vector<16x128xf32>
    %c0_1 = arith.constant 0 : index
    %c0_2 = arith.constant 0 : index
    %1 = vector.load %arg2[%c0_1, %c0_2] : memref<128x128xf32, #tpu.memory_space<vmem>>, vector<128x128xf32>
    %cst = arith.constant dense<0.000000e+00> : vector<16x128xf32>
    %2 = tpu.matmul %0, %1, %cst {dimension_numbers = #tpu.dot_dimension_numbers<[1], [0], [0], [1], [0, 0, 1, 1], [], []>} : vector<16x128xf32>, vector<128x128xf32>, vector<16x128xf32> -> vector<16x128xf32>
    %c0_3 = arith.constant 0 : index
    %c0_4 = arith.constant 0 : index
    %3 = vector.load %arg3[%c0_3, %c0_4] : memref<1x128xf32, #tpu.memory_space<vmem>>, vector<1x128xf32>
    %4 = vector.broadcast %3 : vector<1x128xf32> to vector<16x128xf32>
    %5 = arith.addf %2, %4 : vector<16x128xf32>
    %6 = arith.mulf %5, %5 : vector<16x128xf32>
    %7 = arith.mulf %5, %6 : vector<16x128xf32>
    %cst_5 = arith.constant 4.471500e-02 : f32
    %8 = vector.broadcast %cst_5 : f32 to vector<16x128xf32>
    %9 = arith.mulf %8, %7 : vector<16x128xf32>
    %10 = arith.addf %5, %9 : vector<16x128xf32>
    %cst_6 = arith.constant 0.797884583 : f32
    %11 = vector.broadcast %cst_6 : f32 to vector<16x128xf32>
    %12 = arith.mulf %11, %10 : vector<16x128xf32>
    %13 = math.tanh %12 : vector<16x128xf32>
    %cst_7 = arith.constant 1.000000e+00 : f32
    %14 = vector.broadcast %cst_7 : f32 to vector<16x128xf32>
    %15 = arith.addf %14, %13 : vector<16x128xf32>
    %cst_8 = arith.constant 5.000000e-01 : f32
    %16 = vector.broadcast %cst_8 : f32 to vector<16x128xf32>
    %17 = arith.mulf %16, %15 : vector<16x128xf32>
    %18 = arith.mulf %5, %17 : vector<16x128xf32>
    %c0_9 = arith.constant 0 : index
    %c0_10 = arith.constant 0 : index
    %19 = vector.load %arg4[%c0_9, %c0_10] : memref<128x128xf32, #tpu.memory_space<vmem>>, vector<128x128xf32>
    %cst_11 = arith.constant dense<0.000000e+00> : vector<16x128xf32>
    %20 = tpu.matmul %18, %19, %cst_11 {dimension_numbers = #tpu.dot_dimension_numbers<[1], [0], [0], [1], [0, 0, 1, 1], [], []>} : vector<16x128xf32>, vector<128x128xf32>, vector<16x128xf32> -> vector<16x128xf32>
    %c0_12 = arith.constant 0 : index
    %c0_13 = arith.constant 0 : index
    %21 = vector.load %arg5[%c0_12, %c0_13] : memref<1x128xf32, #tpu.memory_space<vmem>>, vector<1x128xf32>
    %22 = vector.broadcast %21 : vector<1x128xf32> to vector<16x128xf32>
    %23 = arith.addf %20, %22 : vector<16x128xf32>
    %24 = arith.addf %23, %0 : vector<16x128xf32>
    %c0_14 = arith.constant 0 : index
    %c0_15 = arith.constant 0 : index
    %25 = vector.load %arg6[%c0_14, %c0_15] : memref<16x128xf32, #tpu.memory_space<vmem>>, vector<16x128xf32>
    tpu.vector_store %arg6[%c0_14, %c0_15], %24 {strides = array<i32>} : memref<16x128xf32, #tpu.memory_space<vmem>>, vector<16x128xf32>,
    return
  }
  func.func @transform_0(%arg0: i32) -> (i32, i32) {
    %c0_i32 = arith.constant 0 : i32
    %c0_i32_0 = arith.constant 0 : i32
    return %arg0, %c0_i32 : i32, i32
  }
  func.func @transform_1(%arg0: i32) -> (i32, i32) {
    %c0_i32 = arith.constant 0 : i32
    %c0_i32_0 = arith.constant 0 : i32
    %c0_i32_1 = arith.constant 0 : i32
    return %c0_i32, %c0_i32_0 : i32, i32
  }
  func.func @transform_2(%arg0: i32) -> (i32, i32) {
    %c0_i32 = arith.constant 0 : i32
    %c0_i32_0 = arith.constant 0 : i32
    %c0_i32_1 = arith.constant 0 : i32
    return %c0_i32, %c0_i32_0 : i32, i32
  }
  func.func @transform_3(%arg0: i32) -> (i32, i32) {
    %c0_i32 = arith.constant 0 : i32
    %c0_i32_0 = arith.constant 0 : i32
    %c0_i32_1 = arith.constant 0 : i32
    return %c0_i32, %c0_i32_0 : i32, i32
  }
  func.func @transform_4(%arg0: i32) -> (i32, i32) {
    %c0_i32 = arith.constant 0 : i32
    %c0_i32_0 = arith.constant 0 : i32
    %c0_i32_1 = arith.constant 0 : i32
    return %c0_i32, %c0_i32_0 : i32, i32
  }
  func.func @transform_5(%arg0: i32) -> (i32, i32) {
    %c0_i32 = arith.constant 0 : i32
    %c0_i32_0 = arith.constant 0 : i32
    return %arg0, %c0_i32 : i32, i32
  }
}

module attributes {stable_mosaic.version = 11 : i64} {
  func.func @_residual_ff_kernel(%arg0: i32, %arg1: memref<16x128xf32, #tpu.memory_space<vmem>>, %arg2: memref<128x128xf32, #tpu.memory_space<vmem>>, %arg3: memref<1x128xf32, #tpu.memory_space<vmem>>, %arg4: memref<128x128xf32, #tpu.memory_space<vmem>>, %arg5: memref<1x128xf32, #tpu.memory_space<vmem>>, %arg6: memref<16x128xf32, #tpu.memory_space<vmem>>) attributes {dimension_semantics = [#tpu.dimension_semantics<parallel>], iteration_bounds = array<i64: 1>, scalar_prefetch = 0 : i64, scratch_operands = 0 : i64, tpu.core_type = #tpu.core_type<tc>, window_params = [{transform_indices = @transform_0, window_bounds = array<i64: 16, 128>}, {pipeline_mode = #tpu.pipeline_mode<synchronous>, transform_indices = @transform_1, window_bounds = array<i64: 128, 128>}, {pipeline_mode = #tpu.pipeline_mode<synchronous>, transform_indices = @transform_2, window_bounds = array<i64: 1, 128>}, {pipeline_mode = #tpu.pipeline_mode<synchronous>, transform_indices = @transform_3, window_bounds = array<i64: 128, 128>}, {pipeline_mode = #tpu.pipeline_mode<synchronous>, transform_indices = @transform_4, window_bounds = array<i64: 1, 128>}, {transform_indices = @transform_5, window_bounds = array<i64: 16, 128>}]} {
    %c0 = arith.constant 0 : index
    %c0_0 = arith.constant 0 : index
    %0 = vector.load %arg1[%c0, %c0_0] : memref<16x128xf32, #tpu.memory_space<vmem>>, vector<16x128xf32>
    %c0_1 = arith.constant 0 : index
    %c0_2 = arith.constant 0 : index
    %1 = vector.load %arg2[%c0_1, %c0_2] : memref<128x128xf32, #tpu.memory_space<vmem>>, vector<128x128xf32>
    %cst = arith.constant dense<0.000000e+00> : vector<16x128xf32>
    %2 = tpu.matmul %0, %1, %cst {dimension_numbers = #tpu.dot_dimension_numbers<[1], [0], [0], [1], [0, 0, 1, 1], [], []>} : vector<16x128xf32>, vector<128x128xf32>, vector<16x128xf32> -> vector<16x128xf32>
    %c0_3 = arith.constant 0 : index
    %c0_4 = arith.constant 0 : index
    %3 = vector.load %arg3[%c0_3, %c0_4] : memref<1x128xf32, #tpu.memory_space<vmem>>, vector<1x128xf32>
    %4 = vector.broadcast %3 : vector<1x128xf32> to vector<16x128xf32>
    %5 = arith.addf %2, %4 : vector<16x128xf32>
    %6 = arith.mulf %5, %5 : vector<16x128xf32>
    %7 = arith.mulf %5, %6 : vector<16x128xf32>
    %cst_5 = arith.constant 4.471500e-02 : f32
    %8 = vector.broadcast %cst_5 : f32 to vector<16x128xf32>
    %9 = arith.mulf %8, %7 : vector<16x128xf32>
    %10 = arith.addf %5, %9 : vector<16x128xf32>
    %cst_6 = arith.constant 0.797884583 : f32
    %11 = vector.broadcast %cst_6 : f32 to vector<16x128xf32>
    %12 = arith.mulf %11, %10 : vector<16x128xf32>
    %13 = math.tanh %12 : vector<16x128xf32>
    %cst_7 = arith.constant 1.000000e+00 : f32
    %14 = vector.broadcast %cst_7 : f32 to vector<16x128xf32>
    %15 = arith.addf %14, %13 : vector<16x128xf32>
    %cst_8 = arith.constant 5.000000e-01 : f32
    %16 = vector.broadcast %cst_8 : f32 to vector<16x128xf32>
    %17 = arith.mulf %16, %15 : vector<16x128xf32>
    %18 = arith.mulf %5, %17 : vector<16x128xf32>
    %c0_9 = arith.constant 0 : index
    %c0_10 = arith.constant 0 : index
    %19 = vector.load %arg4[%c0_9, %c0_10] : memref<128x128xf32, #tpu.memory_space<vmem>>, vector<128x128xf32>
    %cst_11 = arith.constant dense<0.000000e+00> : vector<16x128xf32>
    %20 = tpu.matmul %18, %19, %cst_11 {dimension_numbers = #tpu.dot_dimension_numbers<[1], [0], [0], [1], [0, 0, 1, 1], [], []>} : vector<16x128xf32>, vector<128x128xf32>, vector<16x128xf32> -> vector<16x128xf32>
    %c0_12 = arith.constant 0 : index
    %c0_13 = arith.constant 0 : index
    %21 = vector.load %arg5[%c0_12, %c0_13] : memref<1x128xf32, #tpu.memory_space<vmem>>, vector<1x128xf32>
    %22 = vector.broadcast %21 : vector<1x128xf32> to vector<16x128xf32>
    %23 = arith.addf %20, %22 : vector<16x128xf32>
    %24 = arith.addf %23, %0 : vector<16x128xf32>
    %c0_14 = arith.constant 0 : index
    %c0_15 = arith.constant 0 : index
    %25 = vector.load %arg6[%c0_14, %c0_15] : memref<16x128xf32, #tpu.memory_space<vmem>>, vector<16x128xf32>
    tpu.vector_store %arg6[%c0_14, %c0_15], %24 {strides = array<i32>} : memref<16x128xf32, #tpu.memory_space<vmem>>, vector<16x128xf32>,
    return
  }
  func.func @transform_0(%arg0: i32) -> (i32, i32) {
    %c0_i32 = arith.constant 0 : i32
    %c0_i32_0 = arith.constant 0 : i32
    return %arg0, %c0_i32 : i32, i32
  }
  func.func @transform_1(%arg0: i32) -> (i32, i32) {
    %c0_i32 = arith.constant 0 : i32
    %c0_i32_0 = arith.constant 0 : i32
    %c0_i32_1 = arith.constant 0 : i32
    return %c0_i32, %c0_i32_0 : i32, i32
  }
  func.func @transform_2(%arg0: i32) -> (i32, i32) {
    %c0_i32 = arith.constant 0 : i32
    %c0_i32_0 = arith.constant 0 : i32
    %c0_i32_1 = arith.constant 0 : i32
    return %c0_i32, %c0_i32_0 : i32, i32
  }
  func.func @transform_3(%arg0: i32) -> (i32, i32) {
    %c0_i32 = arith.constant 0 : i32
    %c0_i32_0 = arith.constant 0 : i32
    %c0_i32_1 = arith.constant 0 : i32
    return %c0_i32, %c0_i32_0 : i32, i32
  }
  func.func @transform_4(%arg0: i32) -> (i32, i32) {
    %c0_i32 = arith.constant 0 : i32
    %c0_i32_0 = arith.constant 0 : i32
    %c0_i32_1 = arith.constant 0 : i32
    return %c0_i32, %c0_i32_0 : i32, i32
  }
  func.func @transform_5(%arg0: i32) -> (i32, i32) {
    %c0_i32 = arith.constant 0 : i32
    %c0_i32_0 = arith.constant 0 : i32
    return %arg0, %c0_i32 : i32, i32
  }
}

</mosaic_0001>

<llo_original>
// kernel: tpu_custom_call.1
$region0: #{tpu_custom_call.1}
  #allocation0 [shape = 'u32[]', space=smem, size = 0x4, offset = 0x4, fixed_abs, tag = 'smem constant byte address 0x4 - core index']
  #allocation1 [shape = 'u32[144,128]{1,0:T(1,128)}', space=vmem, size = 0x12000, scoped, tag = 'internal scratch']
  %s0 = inlined_call_operand.hbm [shape: f32[16,128], index: 0, kind: input, shape index: {}]
  %s1 = inlined_call_operand.hbm [shape: f32[128,128], index: 1, kind: input, shape index: {}]
  %s2 = inlined_call_operand.vmem [shape: f32[1,128], index: 2, kind: input, shape index: {}]
  %s3 = inlined_call_operand.hbm [shape: f32[128,128], index: 3, kind: input, shape index: {}]
  %s4 = inlined_call_operand.vmem [shape: f32[1,128], index: 4, kind: input, shape index: {}]
  %s5 = inlined_call_operand.hbm [shape: f32[16,128], index: 5, kind: output, shape index: {}]
  %s6 = sld [smem:[#allocation0]]
  $region42: #{tpu_custom_call.1} parent=0
    _
  %s8 = ssub.s32 1, %s6
  %s9 = scalar_select 0, %s8, %s6
  $region1: #{tpu_custom_call.1} parent=0
    #allocation2 [shape = 'u8[8192]{0}', space=vmem, size = 0x2000, scoped, tag = 'input window, operand 0, single buffered']
    #allocation3 [shape = 's32[1]{0}', space=sflag, size = 0x4, scoped, tag = 'scoped memory for tpu_custom_call.1']
    #allocation4 [shape = 's32[1]{0}', space=sflag, size = 0x4, scoped, tag = 'scoped memory for tpu_custom_call.1']
    #allocation5 [shape = 'u8[65536]{0}', space=vmem, size = 0x10000, scoped, tag = 'input window, operand 1, single buffered']
    #allocation6 [shape = 's32[1]{0}', space=sflag, size = 0x4, scoped, tag = 'scoped memory for tpu_custom_call.1']
    #allocation7 [shape = 'u8[65536]{0}', space=vmem, size = 0x10000, scoped, tag = 'input window, operand 3, single buffered']
    #allocation8 [shape = 'u8[8192]{0}', space=vmem, size = 0x2000, scoped, tag = 'output window, operand 0, single buffered']
    %10 = vsyncpa [#allocation3], 0
    %11 = vsyncpa [#allocation6], 0
    %12 = vsyncpa [#allocation4], 0
    // Predicated region
    $region2: #{tpu_custom_call.1} parent=1 // pred_check
      _
    $region3: #{tpu_custom_call.1} parent=1 // pred_check_branch
      %14 = sbr.rel (0) target = $region5
    $region4: #{tpu_custom_call.1} parent=1 // pred_region
      %s16 = ssub.s32 256, 256
      %17 = vsyncadd [#allocation3], %s16
      %s18 = sshll.u32 [#allocation2], 4
      %s19 = int_to_ptr.vmem [resolvable:$true] %s18
      %24 = dma.hbm_to_vmem [thread:$0]  %s0, 256, %s19, [#allocation3], 128, 128, 8
    $region5: #{tpu_custom_call.1} parent=1 // pred_fallthru
      _
    // Predicated region
    $region6: #{tpu_custom_call.1} parent=1 // pred_check
      _
    $region7: #{tpu_custom_call.1} parent=1 // pred_check_branch
      %26 = sbr.rel (0) target = $region9
    $region8: #{tpu_custom_call.1} parent=1 // pred_region
      %s28 = ssub.s32 2048, 2048
      %29 = vsyncadd [#allocation6], %s28
      %s30 = sshll.u32 [#allocation5], 4
      %s31 = int_to_ptr.vmem [resolvable:$true] %s30
      %36 = dma.hbm_to_vmem [thread:$0]  %s1, 2048, %s31, [#allocation6], 128, 128, 8
    $region9: #{tpu_custom_call.1} parent=1 // pred_fallthru
      _
    // Predicated region
    $region10: #{tpu_custom_call.1} parent=1 // pred_check
      _
    $region11: #{tpu_custom_call.1} parent=1 // pred_check_branch
      %38 = sbr.rel (0) target = $region13
    $region12: #{tpu_custom_call.1} parent=1 // pred_region
      _
    $region13: #{tpu_custom_call.1} parent=1 // pred_fallthru
      _
    // Predicated region
    $region14: #{tpu_custom_call.1} parent=1 // pred_check
      _
    $region15: #{tpu_custom_call.1} parent=1 // pred_check_branch
      %40 = sbr.rel (0) target = $region17
    $region16: #{tpu_custom_call.1} parent=1 // pred_region
      %s42 = ssub.s32 2048, 2048
      %43 = vsyncadd [#allocation6], %s42
      %s44 = sshll.u32 [#allocation7], 4
      %s45 = int_to_ptr.vmem [resolvable:$true] %s44
      %50 = dma.hbm_to_vmem [thread:$0]  %s3, 2048, %s45, [#allocation6], 128, 128, 8
    $region17: #{tpu_custom_call.1} parent=1 // pred_fallthru
      _
    // Predicated region
    $region18: #{tpu_custom_call.1} parent=1 // pred_check
      _
    $region19: #{tpu_custom_call.1} parent=1 // pred_check_branch
      %52 = sbr.rel (0) target = $region21
    $region20: #{tpu_custom_call.1} parent=1 // pred_region
      _
    $region21: #{tpu_custom_call.1} parent=1 // pred_fallthru
      _
    // Predicated region
    $region22: #{tpu_custom_call.1} parent=1 // pred_check
      _
    $region23: #{tpu_custom_call.1} parent=1 // pred_check_branch
      %54 = sbr.rel (0) target = $region25
    $region24: #{tpu_custom_call.1} parent=1 // pred_region
      %55 = dma.done [#allocation3], 256
    $region25: #{tpu_custom_call.1} parent=1 // pred_fallthru
      _
    // Predicated region
    $region26: #{tpu_custom_call.1} parent=1 // pred_check
      _
    $region27: #{tpu_custom_call.1} parent=1 // pred_check_branch
      %57 = sbr.rel (0) target = $region29
    $region28: #{tpu_custom_call.1} parent=1 // pred_region
      %58 = dma.done [#allocation6], 2048
    $region29: #{tpu_custom_call.1} parent=1 // pred_fallthru
      _
    // Predicated region
    $region30: #{tpu_custom_call.1} parent=1 // pred_check
      _
    $region31: #{tpu_custom_call.1} parent=1 // pred_check_branch
      %60 = sbr.rel (0) target = $region33
    $region32: #{tpu_custom_call.1} parent=1 // pred_region
      %61 = dma.done [#allocation6], 2048
    $region33: #{tpu_custom_call.1} parent=1 // pred_fallthru
      _
    %v62 = vld [vmem:[#allocation2] sm:$0xff]
    %v63 = vld [vmem:[#allocation2 + $0x8] sm:$0xff]
    %v64 = vld [vmem:[#allocation5] sm:$0xff]
    %v65 = vld [vmem:[#allocation5 + $0x8] sm:$0xff]
    %v66 = vld [vmem:[#allocation5 + $0x10] sm:$0xff]
    %v67 = vld [vmem:[#allocation5 + $0x18] sm:$0xff]
    %v68 = vld [vmem:[#allocation5 + $0x20] sm:$0xff]
    %v69 = vld [vmem:[#allocation5 + $0x28] sm:$0xff]
    %v70 = vld [vmem:[#allocation5 + $0x30] sm:$0xff]
    %v71 = vld [vmem:[#allocation5 + $0x38] sm:$0xff]
    %v72 = vld [vmem:[#allocation5 + $0x40] sm:$0xff]
    %v73 = vld [vmem:[#allocation5 + $0x48] sm:$0xff]
    %v74 = vld [vmem:[#allocation5 + $0x50] sm:$0xff]
    %v75 = vld [vmem:[#allocation5 + $0x58] sm:$0xff]
    %v76 = vld [vmem:[#allocation5 + $0x60] sm:$0xff]
    %v77 = vld [vmem:[#allocation5 + $0x68] sm:$0xff]
    %v78 = vld [vmem:[#allocation5 + $0x70] sm:$0xff]
    %v79 = vld [vmem:[#allocation5 + $0x78] sm:$0xff]
    %v80 = vld [vmem:[%s2] sm:$0x1]
    %v82 = vlaneseq
    %v83 = vshrl.u32 %v82, 7
    %v84 = vsub.s32 0, %v83
    %v85 = vrot.slane %v80, %v84
    %87 = vmatprep.subr.mxu0 0.0
    %88 = vmatpush1.msra.mxu0 %v79
    %89 = vmatprep.subr.mxu0 0.0
    %90 = vmatpush1.msra.mxu0 %v78
    %91 = vmatprep.subr.mxu0 0.0
    %92 = vmatpush1.msra.mxu0 %v77
    %93 = vmatprep.subr.mxu0 0.0
    %94 = vmatpush1.msra.mxu0 %v76
    %95 = vmatprep.subr.mxu0 0.0
    %96 = vmatpush1.msra.mxu0 %v75
    %97 = vmatprep.subr.mxu0 0.0
    %98 = vmatpush1.msra.mxu0 %v74
    %99 = vmatprep.subr.mxu0 0.0
    %100 = vmatpush1.msra.mxu0 %v73
    %101 = vmatprep.subr.mxu0 0.0
    %102 = vmatpush1.msra.mxu0 %v72
    %103 = vmatprep.subr.mxu0 0.0
    %104 = vmatpush1.msra.mxu0 %v71
    %105 = vmatprep.subr.mxu0 0.0
    %106 = vmatpush1.msra.mxu0 %v70
    %107 = vmatprep.subr.mxu0 0.0
    %108 = vmatpush1.msra.mxu0 %v69
    %109 = vmatprep.subr.mxu0 0.0
    %110 = vmatpush1.msra.mxu0 %v68
    %111 = vmatprep.subr.mxu0 0.0
    %112 = vmatpush1.msra.mxu0 %v67
    %113 = vmatprep.subr.mxu0 0.0
    %114 = vmatpush1.msra.mxu0 %v66
    %115 = vmatprep.subr.mxu0 0.0
    %116 = vmatpush1.msra.mxu0 %v65
    %117 = vmatprep.subr.mxu0 0.0
    %118 = vmatpush1.msra.mxu0 %v64
    %119 = vmatprep.subr.mxu0 0.0
    %120 = vmatpush2.msra.mxu0 0.0
    %121 = vmatprep.subr.mxu0 0.0
    %122 = vmatpush2.msra.mxu0 0.0
    %123 = vmatprep.subr.mxu0 0.0
    %124 = vmatpush2.msra.mxu0 0.0
    %125 = vmatprep.subr.mxu0 0.0
    %126 = vmatpush2.msra.mxu0 0.0
    %127 = vmatprep.subr.mxu0 0.0
    %128 = vmatpush2.msra.mxu0 0.0
    %129 = vmatprep.subr.mxu0 0.0
    %130 = vmatpush2.msra.mxu0 0.0
    %131 = vmatprep.subr.mxu0 0.0
    %132 = vmatpush2.msra.mxu0 0.0
    %133 = vmatprep.subr.mxu0 0.0
    %134 = vmatpush2.msra.mxu0 0.0
    %135 = vmatprep.subr.mxu0 0.0
    %136 = vmatpush2.msra.mxu0 0.0
    %137 = vmatprep.subr.mxu0 0.0
    %138 = vmatpush2.msra.mxu0 0.0
    %139 = vmatprep.subr.mxu0 0.0
    %140 = vmatpush2.msra.mxu0 0.0
    %141 = vmatprep.subr.mxu0 0.0
    %142 = vmatpush2.msra.mxu0 0.0
    %143 = vmatprep.subr.mxu0 0.0
    %144 = vmatpush2.msra.mxu0 0.0
    %145 = vmatprep.subr.mxu0 0.0
    %146 = vmatpush2.msra.mxu0 0.0
    %147 = vmatprep.subr.mxu0 0.0
    %148 = vmatpush2.msra.mxu0 0.0
    %149 = vmatprep.subr.mxu0 0.0
    %150 = vmatpush2.msra.mxu0 0.0
    %151 = vmatprep.mubr.f32.mxu0 0.0
    %152 = vmatmul.mubr.f32.gmra.mxu0 %v62
    %v153 = vpop.f32.mrf.mxu0
    %v154 = vadd.f32 %v85, %v153
    %v155 = vpop.f32.mrf.mxu0
    %156 = vmatprep.mubr.f32.mxu0 0.0
    %157 = vmatmul.mubr.f32.gmra.mxu0 %v63
    %v158 = vpop.f32.mrf.mxu0
    %v159 = vadd.f32 %v85, %v158
    %v160 = vpop.f32.mrf.mxu0
    %161 = vdwg.mxu0
    %v162 = vmul.f32 %v154, %v154
    %v163 = vmul.f32 %v159, %v159
    %v164 = vmul.f32 %v154, %v162
    %v165 = vmul.f32 %v159, %v163
    %v166 = vmul.f32 %v164, 0.044715
    %v167 = vmul.f32 %v165, 0.044715
    %v168 = vadd.f32 %v154, %v166
    %v169 = vadd.f32 %v159, %v167
    %v170 = vmul.f32 %v168, 0.7978846
    %v171 = vmul.f32 %v169, 0.7978846
    %v172 = vtanh.pop %v170
    %v173 = vtanh.pop %v171
    %v174 = vadd.f32 %v172, 1.0
    %v175 = vadd.f32 %v173, 1.0
    %v176 = vmul.f32 %v174, 0.5
    %v177 = vmul.f32 %v175, 0.5
    %v178 = vmul.f32 %v154, %v176
    %v179 = vmul.f32 %v159, %v177
    %v180 = vld [vmem:[#allocation7] sm:$0xff]
    %v181 = vld [vmem:[#allocation7 + $0x8] sm:$0xff]
    %v182 = vld [vmem:[#allocation7 + $0x10] sm:$0xff]
    %v183 = vld [vmem:[#allocation7 + $0x18] sm:$0xff]
    %v184 = vld [vmem:[#allocation7 + $0x20] sm:$0xff]
    %v185 = vld [vmem:[#allocation7 + $0x28] sm:$0xff]
    %v186 = vld [vmem:[#allocation7 + $0x30] sm:$0xff]
    %v187 = vld [vmem:[#allocation7 + $0x38] sm:$0xff]
    %v188 = vld [vmem:[#allocation7 + $0x40] sm:$0xff]
    %v189 = vld [vmem:[#allocation7 + $0x48] sm:$0xff]
    %v190 = vld [vmem:[#allocation7 + $0x50] sm:$0xff]
    %v191 = vld [vmem:[#allocation7 + $0x58] sm:$0xff]
    %v192 = vld [vmem:[#allocation7 + $0x60] sm:$0xff]
    %v193 = vld [vmem:[#allocation7 + $0x68] sm:$0xff]
    %v194 = vld [vmem:[#allocation7 + $0x70] sm:$0xff]
    %v195 = vld [vmem:[#allocation7 + $0x78] sm:$0xff]
    %v196 = vld [vmem:[%s4] sm:$0x1]
    %v198 = vlaneseq
    %v199 = vshrl.u32 %v198, 7
    %v200 = vsub.s32 0, %v199
    %v201 = vrot.slane %v196, %v200
    %203 = vmatprep.subr.mxu0 0.0
    %204 = vmatpush1.msra.mxu0 %v195
    %205 = vmatprep.subr.mxu0 0.0
    %206 = vmatpush1.msra.mxu0 %v194
    %207 = vmatprep.subr.mxu0 0.0
    %208 = vmatpush1.msra.mxu0 %v193
    %209 = vmatprep.subr.mxu0 0.0
    %210 = vmatpush1.msra.mxu0 %v192
    %211 = vmatprep.subr.mxu0 0.0
    %212 = vmatpush1.msra.mxu0 %v191
    %213 = vmatprep.subr.mxu0 0.0
    %214 = vmatpush1.msra.mxu0 %v190
    %215 = vmatprep.subr.mxu0 0.0
    %216 = vmatpush1.msra.mxu0 %v189
    %217 = vmatprep.subr.mxu0 0.0
    %218 = vmatpush1.msra.mxu0 %v188
    %219 = vmatprep.subr.mxu0 0.0
    %220 = vmatpush1.msra.mxu0 %v187
    %221 = vmatprep.subr.mxu0 0.0
    %222 = vmatpush1.msra.mxu0 %v186
    %223 = vmatprep.subr.mxu0 0.0
    %224 = vmatpush1.msra.mxu0 %v185
    %225 = vmatprep.subr.mxu0 0.0
    %226 = vmatpush1.msra.mxu0 %v184
    %227 = vmatprep.subr.mxu0 0.0
    %228 = vmatpush1.msra.mxu0 %v183
    %229 = vmatprep.subr.mxu0 0.0
    %230 = vmatpush1.msra.mxu0 %v182
    %231 = vmatprep.subr.mxu0 0.0
    %232 = vmatpush1.msra.mxu0 %v181
    %233 = vmatprep.subr.mxu0 0.0
    %234 = vmatpush1.msra.mxu0 %v180
    %235 = vmatprep.subr.mxu0 0.0
    %236 = vmatpush2.msra.mxu0 0.0
    %237 = vmatprep.subr.mxu0 0.0
    %238 = vmatpush2.msra.mxu0 0.0
    %239 = vmatprep.subr.mxu0 0.0
    %240 = vmatpush2.msra.mxu0 0.0
    %241 = vmatprep.subr.mxu0 0.0
    %242 = vmatpush2.msra.mxu0 0.0
    %243 = vmatprep.subr.mxu0 0.0
    %244 = vmatpush2.msra.mxu0 0.0
    %245 = vmatprep.subr.mxu0 0.0
    %246 = vmatpush2.msra.mxu0 0.0
    %247 = vmatprep.subr.mxu0 0.0
    %248 = vmatpush2.msra.mxu0 0.0
    %249 = vmatprep.subr.mxu0 0.0
    %250 = vmatpush2.msra.mxu0 0.0
    %251 = vmatprep.subr.mxu0 0.0
    %252 = vmatpush2.msra.mxu0 0.0
    %253 = vmatprep.subr.mxu0 0.0
    %254 = vmatpush2.msra.mxu0 0.0
    %255 = vmatprep.subr.mxu0 0.0
    %256 = vmatpush2.msra.mxu0 0.0
    %257 = vmatprep.subr.mxu0 0.0
    %258 = vmatpush2.msra.mxu0 0.0
    %259 = vmatprep.subr.mxu0 0.0
    %260 = vmatpush2.msra.mxu0 0.0
    %261 = vmatprep.subr.mxu0 0.0
    %262 = vmatpush2.msra.mxu0 0.0
    %263 = vmatprep.subr.mxu0 0.0
    %264 = vmatpush2.msra.mxu0 0.0
    %265 = vmatprep.subr.mxu0 0.0
    %266 = vmatpush2.msra.mxu0 0.0
    %267 = vmatprep.mubr.f32.mxu0 0.0
    %268 = vmatmul.mubr.f32.gmra.mxu0 %v178
    %v269 = vpop.f32.mrf.mxu0
    %v270 = vadd.f32 %v201, %v269
    %v271 = vpop.f32.mrf.mxu0
    %272 = vmatprep.mubr.f32.mxu0 0.0
    %273 = vmatmul.mubr.f32.gmra.mxu0 %v179
    %v274 = vpop.f32.mrf.mxu0
    %v275 = vadd.f32 %v201, %v274
    %v276 = vpop.f32.mrf.mxu0
    %277 = vdwg.mxu0
    %v278 = vadd.f32 %v270, %v62
    %v279 = vadd.f32 %v275, %v63
    %280 = vst [vmem:[#allocation8] sm:$0xff] %v278
    %281 = vst [vmem:[#allocation8 + $0x8] sm:$0xff] %v279
    // Predicated region
    $region34: #{tpu_custom_call.1} parent=1 // pred_check
      _
    $region35: #{tpu_custom_call.1} parent=1 // pred_check_branch
      %283 = sbr.rel (0) target = $region37
    $region36: #{tpu_custom_call.1} parent=1 // pred_region
      %s285 = ssub.s32 256, 256
      %286 = vsyncadd [#allocation4], %s285
      %s287 = sshll.u32 [#allocation8], 4
      %s288 = int_to_ptr.vmem [resolvable:$true] %s287
      %293 = dma.vmem_to_hbm [thread:$0]  %s288, 256, %s5, [#allocation4], 128, 128, 8
    $region37: #{tpu_custom_call.1} parent=1 // pred_fallthru
      _
    // Predicated region
    $region38: #{tpu_custom_call.1} parent=1 // pred_check
      _
    $region39: #{tpu_custom_call.1} parent=1 // pred_check_branch
      %295 = sbr.rel (0) target = $region41
    $region40: #{tpu_custom_call.1} parent=1 // pred_region
      %296 = dma.done [#allocation4], 256
    $region41: #{tpu_custom_call.1} parent=1 // pred_fallthru
      _
    %297 = vsyncpa [#allocation3], 1
    %298 = vsyncpa [#allocation6], 1
    %299 = vsyncpa [#allocation4], 1

// kernel: tpu_custom_call.1
$region0: #{tpu_custom_call.1}
  #allocation0 [shape = 'u32[]', space=smem, size = 0x4, offset = 0x4, fixed_abs, tag = 'smem constant byte address 0x4 - core index']
  #allocation1 [shape = 'u32[144,128]{1,0:T(1,128)}', space=vmem, size = 0x12000, scoped, tag = 'internal scratch']
  %s0 = inlined_call_operand.hbm [shape: f32[16,128], index: 0, kind: input, shape index: {}]
  %s1 = inlined_call_operand.hbm [shape: f32[128,128], index: 1, kind: input, shape index: {}]
  %s2 = inlined_call_operand.vmem [shape: f32[1,128], index: 2, kind: input, shape index: {}]
  %s3 = inlined_call_operand.hbm [shape: f32[128,128], index: 3, kind: input, shape index: {}]
  %s4 = inlined_call_operand.vmem [shape: f32[1,128], index: 4, kind: input, shape index: {}]
  %s5 = inlined_call_operand.hbm [shape: f32[16,128], index: 5, kind: output, shape index: {}]
  %s6 = sld [smem:[#allocation0]]
  $region42: #{tpu_custom_call.1} parent=0
    _
  %s8 = ssub.s32 1, %s6
  %s9 = scalar_select 0, %s8, %s6
  $region1: #{tpu_custom_call.1} parent=0
    #allocation2 [shape = 'u8[8192]{0}', space=vmem, size = 0x2000, scoped, tag = 'input window, operand 0, single buffered']
    #allocation3 [shape = 's32[1]{0}', space=sflag, size = 0x4, scoped, tag = 'scoped memory for tpu_custom_call.1']
    #allocation4 [shape = 's32[1]{0}', space=sflag, size = 0x4, scoped, tag = 'scoped memory for tpu_custom_call.1']
    #allocation5 [shape = 'u8[65536]{0}', space=vmem, size = 0x10000, scoped, tag = 'input window, operand 1, single buffered']
    #allocation6 [shape = 's32[1]{0}', space=sflag, size = 0x4, scoped, tag = 'scoped memory for tpu_custom_call.1']
    #allocation7 [shape = 'u8[65536]{0}', space=vmem, size = 0x10000, scoped, tag = 'input window, operand 3, single buffered']
    #allocation8 [shape = 'u8[8192]{0}', space=vmem, size = 0x2000, scoped, tag = 'output window, operand 0, single buffered']
    %10 = vsyncpa [#allocation3], 0
    %11 = vsyncpa [#allocation6], 0
    %12 = vsyncpa [#allocation4], 0
    // Predicated region
    $region2: #{tpu_custom_call.1} parent=1 // pred_check
      _
    $region3: #{tpu_custom_call.1} parent=1 // pred_check_branch
      %14 = sbr.rel (0) target = $region5
    $region4: #{tpu_custom_call.1} parent=1 // pred_region
      %s16 = ssub.s32 256, 256
      %17 = vsyncadd [#allocation3], %s16
      %s18 = sshll.u32 [#allocation2], 4
      %s19 = int_to_ptr.vmem [resolvable:$true] %s18
      %24 = dma.hbm_to_vmem [thread:$0]  %s0, 256, %s19, [#allocation3], 128, 128, 8
    $region5: #{tpu_custom_call.1} parent=1 // pred_fallthru
      _
    // Predicated region
    $region6: #{tpu_custom_call.1} parent=1 // pred_check
      _
    $region7: #{tpu_custom_call.1} parent=1 // pred_check_branch
      %26 = sbr.rel (0) target = $region9
    $region8: #{tpu_custom_call.1} parent=1 // pred_region
      %s28 = ssub.s32 2048, 2048
      %29 = vsyncadd [#allocation6], %s28
      %s30 = sshll.u32 [#allocation5], 4
      %s31 = int_to_ptr.vmem [resolvable:$true] %s30
      %36 = dma.hbm_to_vmem [thread:$0]  %s1, 2048, %s31, [#allocation6], 128, 128, 8
    $region9: #{tpu_custom_call.1} parent=1 // pred_fallthru
      _
    // Predicated region
    $region10: #{tpu_custom_call.1} parent=1 // pred_check
      _
    $region11: #{tpu_custom_call.1} parent=1 // pred_check_branch
      %38 = sbr.rel (0) target = $region13
    $region12: #{tpu_custom_call.1} parent=1 // pred_region
      _
    $region13: #{tpu_custom_call.1} parent=1 // pred_fallthru
      _
    // Predicated region
    $region14: #{tpu_custom_call.1} parent=1 // pred_check
      _
    $region15: #{tpu_custom_call.1} parent=1 // pred_check_branch
      %40 = sbr.rel (0) target = $region17
    $region16: #{tpu_custom_call.1} parent=1 // pred_region
      %s42 = ssub.s32 2048, 2048
      %43 = vsyncadd [#allocation6], %s42
      %s44 = sshll.u32 [#allocation7], 4
      %s45 = int_to_ptr.vmem [resolvable:$true] %s44
      %50 = dma.hbm_to_vmem [thread:$0]  %s3, 2048, %s45, [#allocation6], 128, 128, 8
    $region17: #{tpu_custom_call.1} parent=1 // pred_fallthru
      _
    // Predicated region
    $region18: #{tpu_custom_call.1} parent=1 // pred_check
      _
    $region19: #{tpu_custom_call.1} parent=1 // pred_check_branch
      %52 = sbr.rel (0) target = $region21
    $region20: #{tpu_custom_call.1} parent=1 // pred_region
      _
    $region21: #{tpu_custom_call.1} parent=1 // pred_fallthru
      _
    // Predicated region
    $region22: #{tpu_custom_call.1} parent=1 // pred_check
      _
    $region23: #{tpu_custom_call.1} parent=1 // pred_check_branch
      %54 = sbr.rel (0) target = $region25
    $region24: #{tpu_custom_call.1} parent=1 // pred_region
      %55 = dma.done [#allocation3], 256
    $region25: #{tpu_custom_call.1} parent=1 // pred_fallthru
      _
    // Predicated region
    $region26: #{tpu_custom_call.1} parent=1 // pred_check
      _
    $region27: #{tpu_custom_call.1} parent=1 // pred_check_branch
      %57 = sbr.rel (0) target = $region29
    $region28: #{tpu_custom_call.1} parent=1 // pred_region
      %58 = dma.done [#allocation6], 2048
    $region29: #{tpu_custom_call.1} parent=1 // pred_fallthru
      _
    // Predicated region
    $region30: #{tpu_custom_call.1} parent=1 // pred_check
      _
    $region31: #{tpu_custom_call.1} parent=1 // pred_check_branch
      %60 = sbr.rel (0) target = $region33
    $region32: #{tpu_custom_call.1} parent=1 // pred_region
      %61 = dma.done [#allocation6], 2048
    $region33: #{tpu_custom_call.1} parent=1 // pred_fallthru
      _
    %v62 = vld [vmem:[#allocation2] sm:$0xff]
    %v63 = vld [vmem:[#allocation2 + $0x8] sm:$0xff]
    %v64 = vld [vmem:[#allocation5] sm:$0xff]
    %v65 = vld [vmem:[#allocation5 + $0x8] sm:$0xff]
    %v66 = vld [vmem:[#allocation5 + $0x10] sm:$0xff]
    %v67 = vld [vmem:[#allocation5 + $0x18] sm:$0xff]
    %v68 = vld [vmem:[#allocation5 + $0x20] sm:$0xff]
    %v69 = vld [vmem:[#allocation5 + $0x28] sm:$0xff]
    %v70 = vld [vmem:[#allocation5 + $0x30] sm:$0xff]
    %v71 = vld [vmem:[#allocation5 + $0x38] sm:$0xff]
    %v72 = vld [vmem:[#allocation5 + $0x40] sm:$0xff]
    %v73 = vld [vmem:[#allocation5 + $0x48] sm:$0xff]
    %v74 = vld [vmem:[#allocation5 + $0x50] sm:$0xff]
    %v75 = vld [vmem:[#allocation5 + $0x58] sm:$0xff]
    %v76 = vld [vmem:[#allocation5 + $0x60] sm:$0xff]
    %v77 = vld [vmem:[#allocation5 + $0x68] sm:$0xff]
    %v78 = vld [vmem:[#allocation5 + $0x70] sm:$0xff]
    %v79 = vld [vmem:[#allocation5 + $0x78] sm:$0xff]
    %v80 = vld [vmem:[%s2] sm:$0x1]
    %v82 = vlaneseq
    %v83 = vshrl.u32 %v82, 7
    %v84 = vsub.s32 0, %v83
    %v85 = vrot.slane %v80, %v84
    %87 = vmatprep.subr.mxu0 0.0
    %88 = vmatpush1.msra.mxu0 %v79
    %89 = vmatprep.subr.mxu0 0.0
    %90 = vmatpush1.msra.mxu0 %v78
    %91 = vmatprep.subr.mxu0 0.0
    %92 = vmatpush1.msra.mxu0 %v77
    %93 = vmatprep.subr.mxu0 0.0
    %94 = vmatpush1.msra.mxu0 %v76
    %95 = vmatprep.subr.mxu0 0.0
    %96 = vmatpush1.msra.mxu0 %v75
    %97 = vmatprep.subr.mxu0 0.0
    %98 = vmatpush1.msra.mxu0 %v74
    %99 = vmatprep.subr.mxu0 0.0
    %100 = vmatpush1.msra.mxu0 %v73
    %101 = vmatprep.subr.mxu0 0.0
    %102 = vmatpush1.msra.mxu0 %v72
    %103 = vmatprep.subr.mxu0 0.0
    %104 = vmatpush1.msra.mxu0 %v71
    %105 = vmatprep.subr.mxu0 0.0
    %106 = vmatpush1.msra.mxu0 %v70
    %107 = vmatprep.subr.mxu0 0.0
    %108 = vmatpush1.msra.mxu0 %v69
    %109 = vmatprep.subr.mxu0 0.0
    %110 = vmatpush1.msra.mxu0 %v68
    %111 = vmatprep.subr.mxu0 0.0
    %112 = vmatpush1.msra.mxu0 %v67
    %113 = vmatprep.subr.mxu0 0.0
    %114 = vmatpush1.msra.mxu0 %v66
    %115 = vmatprep.subr.mxu0 0.0
    %116 = vmatpush1.msra.mxu0 %v65
    %117 = vmatprep.subr.mxu0 0.0
    %118 = vmatpush1.msra.mxu0 %v64
    %119 = vmatprep.subr.mxu0 0.0
    %120 = vmatpush2.msra.mxu0 0.0
    %121 = vmatprep.subr.mxu0 0.0
    %122 = vmatpush2.msra.mxu0 0.0
    %123 = vmatprep.subr.mxu0 0.0
    %124 = vmatpush2.msra.mxu0 0.0
    %125 = vmatprep.subr.mxu0 0.0
    %126 = vmatpush2.msra.mxu0 0.0
    %127 = vmatprep.subr.mxu0 0.0
    %128 = vmatpush2.msra.mxu0 0.0
    %129 = vmatprep.subr.mxu0 0.0
    %130 = vmatpush2.msra.mxu0 0.0
    %131 = vmatprep.subr.mxu0 0.0
    %132 = vmatpush2.msra.mxu0 0.0
    %133 = vmatprep.subr.mxu0 0.0
    %134 = vmatpush2.msra.mxu0 0.0
    %135 = vmatprep.subr.mxu0 0.0
    %136 = vmatpush2.msra.mxu0 0.0
    %137 = vmatprep.subr.mxu0 0.0
    %138 = vmatpush2.msra.mxu0 0.0
    %139 = vmatprep.subr.mxu0 0.0
    %140 = vmatpush2.msra.mxu0 0.0
    %141 = vmatprep.subr.mxu0 0.0
    %142 = vmatpush2.msra.mxu0 0.0
    %143 = vmatprep.subr.mxu0 0.0
    %144 = vmatpush2.msra.mxu0 0.0
    %145 = vmatprep.subr.mxu0 0.0
    %146 = vmatpush2.msra.mxu0 0.0
    %147 = vmatprep.subr.mxu0 0.0
    %148 = vmatpush2.msra.mxu0 0.0
    %149 = vmatprep.subr.mxu0 0.0
    %150 = vmatpush2.msra.mxu0 0.0
    %151 = vmatprep.mubr.f32.mxu0 0.0
    %152 = vmatmul.mubr.f32.gmra.mxu0 %v62
    %v153 = vpop.f32.mrf.mxu0
    %v154 = vadd.f32 %v85, %v153
    %v155 = vpop.f32.mrf.mxu0
    %156 = vmatprep.mubr.f32.mxu0 0.0
    %157 = vmatmul.mubr.f32.gmra.mxu0 %v63
    %v158 = vpop.f32.mrf.mxu0
    %v159 = vadd.f32 %v85, %v158
    %v160 = vpop.f32.mrf.mxu0
    %161 = vdwg.mxu0
    %v162 = vmul.f32 %v154, %v154
    %v163 = vmul.f32 %v159, %v159
    %v164 = vmul.f32 %v154, %v162
    %v165 = vmul.f32 %v159, %v163
    %v166 = vmul.f32 %v164, 0.044715
    %v167 = vmul.f32 %v165, 0.044715
    %v168 = vadd.f32 %v154, %v166
    %v169 = vadd.f32 %v159, %v167
    %v170 = vmul.f32 %v168, 0.7978846
    %v171 = vmul.f32 %v169, 0.7978846
    %v172 = vtanh.pop %v170
    %v173 = vtanh.pop %v171
    %v174 = vadd.f32 %v172, 1.0
    %v175 = vadd.f32 %v173, 1.0
    %v176 = vmul.f32 %v174, 0.5
    %v177 = vmul.f32 %v175, 0.5
    %v178 = vmul.f32 %v154, %v176
    %v179 = vmul.f32 %v159, %v177
    %v180 = vld [vmem:[#allocation7] sm:$0xff]
    %v181 = vld [vmem:[#allocation7 + $0x8] sm:$0xff]
    %v182 = vld [vmem:[#allocation7 + $0x10] sm:$0xff]
    %v183 = vld [vmem:[#allocation7 + $0x18] sm:$0xff]
    %v184 = vld [vmem:[#allocation7 + $0x20] sm:$0xff]
    %v185 = vld [vmem:[#allocation7 + $0x28] sm:$0xff]
    %v186 = vld [vmem:[#allocation7 + $0x30] sm:$0xff]
    %v187 = vld [vmem:[#allocation7 + $0x38] sm:$0xff]
    %v188 = vld [vmem:[#allocation7 + $0x40] sm:$0xff]
    %v189 = vld [vmem:[#allocation7 + $0x48] sm:$0xff]
    %v190 = vld [vmem:[#allocation7 + $0x50] sm:$0xff]
    %v191 = vld [vmem:[#allocation7 + $0x58] sm:$0xff]
    %v192 = vld [vmem:[#allocation7 + $0x60] sm:$0xff]
    %v193 = vld [vmem:[#allocation7 + $0x68] sm:$0xff]
    %v194 = vld [vmem:[#allocation7 + $0x70] sm:$0xff]
    %v195 = vld [vmem:[#allocation7 + $0x78] sm:$0xff]
    %v196 = vld [vmem:[%s4] sm:$0x1]
    %v198 = vlaneseq
    %v199 = vshrl.u32 %v198, 7
    %v200 = vsub.s32 0, %v199
    %v201 = vrot.slane %v196, %v200
    %203 = vmatprep.subr.mxu0 0.0
    %204 = vmatpush1.msra.mxu0 %v195
    %205 = vmatprep.subr.mxu0 0.0
    %206 = vmatpush1.msra.mxu0 %v194
    %207 = vmatprep.subr.mxu0 0.0
    %208 = vmatpush1.msra.mxu0 %v193
    %209 = vmatprep.subr.mxu0 0.0
    %210 = vmatpush1.msra.mxu0 %v192
    %211 = vmatprep.subr.mxu0 0.0
    %212 = vmatpush1.msra.mxu0 %v191
    %213 = vmatprep.subr.mxu0 0.0
    %214 = vmatpush1.msra.mxu0 %v190
    %215 = vmatprep.subr.mxu0 0.0
    %216 = vmatpush1.msra.mxu0 %v189
    %217 = vmatprep.subr.mxu0 0.0
    %218 = vmatpush1.msra.mxu0 %v188
    %219 = vmatprep.subr.mxu0 0.0
    %220 = vmatpush1.msra.mxu0 %v187
    %221 = vmatprep.subr.mxu0 0.0
    %222 = vmatpush1.msra.mxu0 %v186
    %223 = vmatprep.subr.mxu0 0.0
    %224 = vmatpush1.msra.mxu0 %v185
    %225 = vmatprep.subr.mxu0 0.0
    %226 = vmatpush1.msra.mxu0 %v184
    %227 = vmatprep.subr.mxu0 0.0
    %228 = vmatpush1.msra.mxu0 %v183
    %229 = vmatprep.subr.mxu0 0.0
    %230 = vmatpush1.msra.mxu0 %v182
    %231 = vmatprep.subr.mxu0 0.0
    %232 = vmatpush1.msra.mxu0 %v181
    %233 = vmatprep.subr.mxu0 0.0
    %234 = vmatpush1.msra.mxu0 %v180
    %235 = vmatprep.subr.mxu0 0.0
    %236 = vmatpush2.msra.mxu0 0.0
    %237 = vmatprep.subr.mxu0 0.0
    %238 = vmatpush2.msra.mxu0 0.0
    %239 = vmatprep.subr.mxu0 0.0
    %240 = vmatpush2.msra.mxu0 0.0
    %241 = vmatprep.subr.mxu0 0.0
    %242 = vmatpush2.msra.mxu0 0.0
    %243 = vmatprep.subr.mxu0 0.0
    %244 = vmatpush2.msra.mxu0 0.0
    %245 = vmatprep.subr.mxu0 0.0
    %246 = vmatpush2.msra.mxu0 0.0
    %247 = vmatprep.subr.mxu0 0.0
    %248 = vmatpush2.msra.mxu0 0.0
    %249 = vmatprep.subr.mxu0 0.0
    %250 = vmatpush2.msra.mxu0 0.0
    %251 = vmatprep.subr.mxu0 0.0
    %252 = vmatpush2.msra.mxu0 0.0
    %253 = vmatprep.subr.mxu0 0.0
    %254 = vmatpush2.msra.mxu0 0.0
    %255 = vmatprep.subr.mxu0 0.0
    %256 = vmatpush2.msra.mxu0 0.0
    %257 = vmatprep.subr.mxu0 0.0
    %258 = vmatpush2.msra.mxu0 0.0
    %259 = vmatprep.subr.mxu0 0.0
    %260 = vmatpush2.msra.mxu0 0.0
    %261 = vmatprep.subr.mxu0 0.0
    %262 = vmatpush2.msra.mxu0 0.0
    %263 = vmatprep.subr.mxu0 0.0
    %264 = vmatpush2.msra.mxu0 0.0
    %265 = vmatprep.subr.mxu0 0.0
    %266 = vmatpush2.msra.mxu0 0.0
    %267 = vmatprep.mubr.f32.mxu0 0.0
    %268 = vmatmul.mubr.f32.gmra.mxu0 %v178
    %v269 = vpop.f32.mrf.mxu0
    %v270 = vadd.f32 %v201, %v269
    %v271 = vpop.f32.mrf.mxu0
    %272 = vmatprep.mubr.f32.mxu0 0.0
    %273 = vmatmul.mubr.f32.gmra.mxu0 %v179
    %v274 = vpop.f32.mrf.mxu0
    %v275 = vadd.f32 %v201, %v274
    %v276 = vpop.f32.mrf.mxu0
    %277 = vdwg.mxu0
    %v278 = vadd.f32 %v270, %v62
    %v279 = vadd.f32 %v275, %v63
    %280 = vst [vmem:[#allocation8] sm:$0xff] %v278
    %281 = vst [vmem:[#allocation8 + $0x8] sm:$0xff] %v279
    // Predicated region
    $region34: #{tpu_custom_call.1} parent=1 // pred_check
      _
    $region35: #{tpu_custom_call.1} parent=1 // pred_check_branch
      %283 = sbr.rel (0) target = $region37
    $region36: #{tpu_custom_call.1} parent=1 // pred_region
      %s285 = ssub.s32 256, 256
      %286 = vsyncadd [#allocation4], %s285
      %s287 = sshll.u32 [#allocation8], 4
      %s288 = int_to_ptr.vmem [resolvable:$true] %s287
      %293 = dma.vmem_to_hbm [thread:$0]  %s288, 256, %s5, [#allocation4], 128, 128, 8
    $region37: #{tpu_custom_call.1} parent=1 // pred_fallthru
      _
    // Predicated region
    $region38: #{tpu_custom_call.1} parent=1 // pred_check
      _
    $region39: #{tpu_custom_call.1} parent=1 // pred_check_branch
      %295 = sbr.rel (0) target = $region41
    $region40: #{tpu_custom_call.1} parent=1 // pred_region
      %296 = dma.done [#allocation4], 256
    $region41: #{tpu_custom_call.1} parent=1 // pred_fallthru
      _
    %297 = vsyncpa [#allocation3], 1
    %298 = vsyncpa [#allocation6], 1
    %299 = vsyncpa [#allocation4], 1

</llo_original>
